<compile_context>
chip_gen: v7x
topology: tpu7x:2x2x1
jax: 0.10.0
libtpu: 0.0.40
codegen_flags: <defaults>
</compile_context>

<pallas_src>
import jax
import jax.numpy as jnp
from jax.experimental import pallas as pl
from jax.experimental.pallas import tpu as pltpu


# ---------------------------------------------------------------------------
# Kernel 1: lane-dense mz/ab stack -> (2, B, P).
# Two plain VMEM row copies; no concat / cross-lane interleave, no masked
# last-dim=2 stores.  Downstream code that wants the PyTorch (B, P, 2) layout
# can transpose outside (or better: consume (2, B, P) directly).
# ---------------------------------------------------------------------------
def _encinp_lane_dense_kernel(mz_ref, ab_ref, out_ref):
    out_ref[0, :, :] = mz_ref[...].astype(out_ref.dtype)
    out_ref[1, :, :] = ab_ref[...].astype(out_ref.dtype)


def encinp_mzab_lane_dense(mz: jax.Array, ab: jax.Array, out_dtype=None) -> jax.Array:
    """Pallas lane-dense variant of Seq2Seq.encinp's concat: returns (2, B, P)."""
    assert mz.shape == ab.shape and mz.ndim == 2
    B, P = mz.shape
    dtype = out_dtype if out_dtype is not None else mz.dtype
    return pl.pallas_call(
        _encinp_lane_dense_kernel,
        out_shape=jax.ShapeDtypeStruct((2, B, P), dtype),
        in_specs=[
            pl.BlockSpec(memory_space=pltpu.MemorySpace.VMEM),
            pl.BlockSpec(memory_space=pltpu.MemorySpace.VMEM),
        ],
        out_specs=pl.BlockSpec(memory_space=pltpu.MemorySpace.VMEM),
    )(mz, ab)


# ---------------------------------------------------------------------------
# Kernel 2: fused encoder-input projection.
#   out[b, p, :] = mz[b, p] * W[0, :] + ab[b, p] * W[1, :] + bias[:]
# Equivalent to cat([mz,ab],-1) @ W(2,D) + b, but the (B,P,2) intermediate is
# never written to HBM and the K=2 matmul never touches the MXU — it is a
# broadcast-FMA over lane-dense (·, D) tiles on the VPU.
# ---------------------------------------------------------------------------
def _fused_encinp_proj_kernel(mz_ref, ab_ref, w_ref, b_ref, out_ref):
    # mz_ref, ab_ref : (B, P)   w_ref : (2, D)   b_ref : (1, D)   out_ref : (B, P, D)
    w = w_ref[...].astype(jnp.float32)           # (2, D)
    mz = mz_ref[...].astype(jnp.float32)         # (B, P)
    ab = ab_ref[...].astype(jnp.float32)         # (B, P)
    acc = (mz[:, :, None] * w[0][None, None, :]
           + ab[:, :, None] * w[1][None, None, :]
           + b_ref[...].astype(jnp.float32)[None, :, :])
    out_ref[...] = acc.astype(out_ref.dtype)


def fused_encinp_projection(mz: jax.Array, ab: jax.Array,
                            w: jax.Array, b: jax.Array,
                            out_dtype=None) -> jax.Array:
    """Fused (concat + first linear) encoder input projection: (B, P, D)."""
    assert mz.shape == ab.shape and mz.ndim == 2
    B, P = mz.shape
    K, D = w.shape
    assert K == 2, "projection weight must have K=2 (mz, ab)"
    dtype = out_dtype if out_dtype is not None else w.dtype
    return pl.pallas_call(
        _fused_encinp_proj_kernel,
        out_shape=jax.ShapeDtypeStruct((B, P, D), dtype),
        in_specs=[
            pl.BlockSpec(memory_space=pltpu.MemorySpace.VMEM),
            pl.BlockSpec(memory_space=pltpu.MemorySpace.VMEM),
            pl.BlockSpec(memory_space=pltpu.MemorySpace.VMEM),
            pl.BlockSpec(memory_space=pltpu.MemorySpace.VMEM),
        ],
        out_specs=pl.BlockSpec(memory_space=pltpu.MemorySpace.VMEM),
    )(mz, ab, w, b.reshape(1, D))


# ---------------------------------------------------------------------------
# JAX port of the Seq2Seq module (module-local computation only).
# ---------------------------------------------------------------------------
class Seq2SeqPallas:
    """JAX/Pallas port of models/seq2seq.py::Seq2Seq.

    The referenced `Encoder` class is defined elsewhere (not in the provided
    source), so only the module-local computation (`encinp`) is implemented.
    """

    def __init__(self, encoder_config, top_peaks, use_charge=False, use_mass=False):
        self.encoder_dict = encoder_config
        self.top_peaks = top_peaks
        self.use_charge = use_charge
        self.use_mass = use_mass
        # TODO(synk): `Encoder(sequence_length=top_peaks, **encoder_config)` is not
        # defined in the provided module; its parameters / forward cannot be ported.

    def encinp(self, batch, mask_length=True, return_mask=False, lane_dense=False):
        if lane_dense:
            # Pallas lane-dense layout (2, B, P) for an encoder adapted to it.
            mzab = encinp_mzab_lane_dense(batch['mz'], batch['ab'])
        else:
            # Module-faithful (B, P, 2): a few-KB stack — let XLA fuse it into
            # the consumer instead of paying a pallas_call launch for it.
            mzab = jnp.stack([batch['mz'], batch['ab']], axis=-1)
        model_inp = {
            'x': mzab,
            'charge': batch['charge'] if self.use_charge else None,
            'mass': batch['mass'] if self.use_mass else None,
            'length': batch['length'] if mask_length else None,
            'return_mask': return_mask,
        }
        return model_inp

    def encoder_embedding(self, batch):
        encoder_input = self.encinp(batch)
        # TODO(synk): would call self.encoder(**encoder_input); Encoder is undefined.
        # `fused_encinp_projection` above shows how its first linear layer should
        # be fused with encinp on TPU.
        return encoder_input

    def forward(self, *args, **kwargs):
        # PyTorch forward body is `pass` -> returns None.
        return None

    __call__ = forward


if __name__ == "__main__":
    # Small shapes consistent with the module: batch=2, top_peaks(seq)=8,
    # encoder hidden D=128 (lane-dense) for the fused-projection demo.
    B, P, D = 2, 8, 128
    key = jax.random.PRNGKey(0)
    k_mz, k_ab, k_w, k_b = jax.random.split(key, 4)

    batch = {
        'mz': jax.random.uniform(k_mz, (B, P), dtype=jnp.float32) * 2000.0,
        'ab': jax.random.uniform(k_ab, (B, P), dtype=jnp.float32),
        'charge': jnp.ones((B,), dtype=jnp.float32),
        'mass': jnp.full((B,), 1500.0, dtype=jnp.float32),
        'length': jnp.full((B,), P, dtype=jnp.int32),
    }

    model = Seq2SeqPallas(encoder_config={}, top_peaks=P)

    # Reference of th.cat([mz[...,None], ab[...,None]], -1)
    ref_mzab = jnp.concatenate(
        [batch['mz'][..., None], batch['ab'][..., None]], axis=-1)

    # --- 1) Default encinp path (jnp.stack, XLA-fused): module-faithful (B,P,2)
    model_inp = model.encinp(batch)
    mzab = jax.block_until_ready(model_inp['x'])
    assert mzab.shape == (B, P, 2)
    assert jnp.allclose(mzab, ref_mzab), "encinp (default) output mismatch"

    # --- 2) Pallas lane-dense kernel: (2, B, P), two plain row-copy stores
    mzab_2bp = jax.block_until_ready(
        encinp_mzab_lane_dense(batch['mz'], batch['ab']))
    assert mzab_2bp.shape == (2, B, P)
    assert jnp.allclose(mzab_2bp[0], batch['mz'])
    assert jnp.allclose(mzab_2bp[1], batch['ab'])
    assert jnp.allclose(jnp.moveaxis(mzab_2bp, 0, -1), ref_mzab), \
        "Pallas lane-dense encinp mismatch"

    # --- 3) Fused encinp + first projection (VPU broadcast-FMA, no (B,P,2) temp)
    w = jax.random.normal(k_w, (2, D), dtype=jnp.float32) * 0.1
    b = jax.random.normal(k_b, (D,), dtype=jnp.float32) * 0.01
    out = jax.block_until_ready(
        fused_encinp_projection(batch['mz'], batch['ab'], w, b))
    ref_proj = jnp.einsum('bpk,kd->bpd', ref_mzab, w) + b
    assert out.shape == (B, P, D)
    assert jnp.allclose(out, ref_proj, rtol=1e-5, atol=1e-4), \
        "fused encinp projection mismatch"

    # forward() is `pass` in the reference module -> None.
    assert model.forward() is None

    print("KERNEL_OK")
</pallas_src>

<mosaic_0001>
module attributes {stable_mosaic.version = 11 : i64} {
  func.func @_encinp_lane_dense_kernel(%arg0: memref<2x8xf32, #tpu.memory_space<vmem>>, %arg1: memref<2x8xf32, #tpu.memory_space<vmem>>, %arg2: memref<2x2x8xf32, #tpu.memory_space<vmem>>) attributes {dimension_semantics = [], scalar_prefetch = 0 : i64, scratch_operands = 0 : i64, tpu.core_type = #tpu.core_type<tc>} {
    %c0 = arith.constant 0 : index
    %c0_0 = arith.constant 0 : index
    %0 = vector.load %arg0[%c0, %c0_0] : memref<2x8xf32, #tpu.memory_space<vmem>>, vector<2x8xf32>
    %c0_1 = arith.constant 0 : index
    %c0_2 = arith.constant 0 : index
    %c0_3 = arith.constant 0 : index
    %1 = vector.load %arg2[%c0_1, %c0_2, %c0_3] : memref<2x2x8xf32, #tpu.memory_space<vmem>>, vector<1x2x8xf32>
    %2 = vector.shape_cast %1 : vector<1x2x8xf32> to vector<2x8xf32>
    %3 = vector.shape_cast %0 : vector<2x8xf32> to vector<1x2x8xf32>
    tpu.vector_store %arg2[%c0_1, %c0_2, %c0_3], %3 {strides = array<i32>} : memref<2x2x8xf32, #tpu.memory_space<vmem>>, vector<1x2x8xf32>,
    %c0_4 = arith.constant 0 : index
    %c0_5 = arith.constant 0 : index
    %4 = vector.load %arg1[%c0_4, %c0_5] : memref<2x8xf32, #tpu.memory_space<vmem>>, vector<2x8xf32>
    %c1 = arith.constant 1 : index
    %c0_6 = arith.constant 0 : index
    %c0_7 = arith.constant 0 : index
    %5 = vector.load %arg2[%c1, %c0_6, %c0_7] : memref<2x2x8xf32, #tpu.memory_space<vmem>>, vector<1x2x8xf32>
    %6 = vector.shape_cast %5 : vector<1x2x8xf32> to vector<2x8xf32>
    %7 = vector.shape_cast %4 : vector<2x8xf32> to vector<1x2x8xf32>
    tpu.vector_store %arg2[%c1, %c0_6, %c0_7], %7 {strides = array<i32>} : memref<2x2x8xf32, #tpu.memory_space<vmem>>, vector<1x2x8xf32>,
    return
  }
}

</mosaic_0001>

<llo_original>
// kernel: tpu_custom_call.1
$region0: #{tpu_custom_call.1}
  #allocation0 [shape = 'u32[]', space=smem, size = 0x4, offset = 0x4, fixed_abs, tag = 'smem constant byte address 0x4 - core index']
  #allocation1 [shape = 'u32[144,128]{1,0:T(1,128)}', space=vmem, size = 0x12000, scoped, tag = 'internal scratch']
  %s0 = inlined_call_operand.hbm [shape: f32[2,8], index: 0, kind: input, shape index: {}]
  %s1 = inlined_call_operand.vmem [shape: f32[2,8], index: 1, kind: input, shape index: {}]
  %s2 = inlined_call_operand.hbm [shape: f32[2,2,8], index: 2, kind: output, shape index: {}]
  %s3 = sld [smem:[#allocation0]]
  $region22: #{tpu_custom_call.1} parent=0
    _
  %s5 = ssub.s32 1, %s3
  %s6 = scalar_select 0, %s5, %s3
  $region1: #{tpu_custom_call.1} parent=0
    #allocation2 [shape = 'u8[1024]{0}', space=vmem, size = 0x400, scoped, tag = 'input window, operand 0, single buffered']
    #allocation3 [shape = 's32[1]{0}', space=sflag, size = 0x4, scoped, tag = 'scoped memory for tpu_custom_call.1']
    #allocation4 [shape = 's32[1]{0}', space=sflag, size = 0x4, scoped, tag = 'scoped memory for tpu_custom_call.1']
    #allocation5 [shape = 'u8[2048]{0}', space=vmem, size = 0x800, scoped, tag = 'output window, operand 0, single buffered']
    %7 = vsyncpa [#allocation3], 0
    %8 = vsyncpa [#allocation4], 0
    // Predicated region
    $region2: #{tpu_custom_call.1} parent=1 // pred_check
      _
    $region3: #{tpu_custom_call.1} parent=1 // pred_check_branch
      %10 = sbr.rel (0) target = $region5
    $region4: #{tpu_custom_call.1} parent=1 // pred_region
      %s12 = ssub.s32 32, 32
      %13 = vsyncadd [#allocation3], %s12
      %s15 = sshll.u32 [#allocation2], 4
      %s16 = int_to_ptr.vmem [resolvable:$true] %s15
      %18 = dma.hbm_to_vmem [thread:$0]  %s0, 32, %s16, [#allocation3]
    $region5: #{tpu_custom_call.1} parent=1 // pred_fallthru
      _
    // Predicated region
    $region6: #{tpu_custom_call.1} parent=1 // pred_check
      _
    $region7: #{tpu_custom_call.1} parent=1 // pred_check_branch
      %20 = sbr.rel (0) target = $region9
    $region8: #{tpu_custom_call.1} parent=1 // pred_region
      _
    $region9: #{tpu_custom_call.1} parent=1 // pred_fallthru
      _
    // Predicated region
    $region10: #{tpu_custom_call.1} parent=1 // pred_check
      _
    $region11: #{tpu_custom_call.1} parent=1 // pred_check_branch
      %22 = sbr.rel (0) target = $region13
    $region12: #{tpu_custom_call.1} parent=1 // pred_region
      %23 = dma.done [#allocation3], 32
    $region13: #{tpu_custom_call.1} parent=1 // pred_fallthru
      _
    %v24 = vld [vmem:[#allocation2] sm:$0x3]
    %vm25 = vcmask 58368
    %26 = vst.msk [vmem:[#allocation5] sm:$0x3] %vm25, %v24
    %v27 = vld [vmem:[%s1] sm:$0x3]
    %s28 = scalar_lea.vmem [#allocation5], 2
    %29 = vst.msk [vmem:[%s28] sm:$0x3] %vm25, %v27
    // Predicated region
    $region14: #{tpu_custom_call.1} parent=1 // pred_check
      _
    $region15: #{tpu_custom_call.1} parent=1 // pred_check_branch
      %31 = sbr.rel (0) target = $region17
    $region16: #{tpu_custom_call.1} parent=1 // pred_region
      %s33 = ssub.s32 64, 64
      %34 = vsyncadd [#allocation4], %s33
      %s35 = sshll.u32 [#allocation5], 4
      %s36 = int_to_ptr.vmem [resolvable:$true] %s35
      %41 = dma.vmem_to_hbm [thread:$0]  %s36, 64, %s2, [#allocation4], 32, 32, 2
    $region17: #{tpu_custom_call.1} parent=1 // pred_fallthru
      _
    // Predicated region
    $region18: #{tpu_custom_call.1} parent=1 // pred_check
      _
    $region19: #{tpu_custom_call.1} parent=1 // pred_check_branch
      %43 = sbr.rel (0) target = $region21
    $region20: #{tpu_custom_call.1} parent=1 // pred_region
      %44 = dma.done [#allocation4], 64
    $region21: #{tpu_custom_call.1} parent=1 // pred_fallthru
      _
    %45 = vsyncpa [#allocation3], 1
    %46 = vsyncpa [#allocation4], 1

</llo_original>
